<compile_context>
chip_gen: v7x
topology: tpu7x:2x2x1
jax: 0.10.0
libtpu: 0.0.40
codegen_flags: <defaults>
</compile_context>

<pallas_src>
import functools

import jax
import jax.numpy as jnp
from jax.experimental import pallas as pl
from jax.experimental.pallas import tpu as pltpu


def _round_up(n, m):
    return ((n + m - 1) // m) * m


def _mlp_kernel(x_ref, w1_ref, b1_ref, w2_ref, b2_ref, o_ref):
    # Fused Linear -> ReLU -> Linear on one batch tile, all operands in VMEM.
    x = x_ref[...]
    h = jnp.dot(x, w1_ref[...], preferred_element_type=jnp.float32) + b1_ref[...]
    h = jnp.maximum(h, 0.0)                                   # ReLU (f32 VPU)
    y = jnp.dot(h, w2_ref[...], preferred_element_type=jnp.float32) + b2_ref[...]
    o_ref[...] = y.astype(o_ref.dtype)


def prepare_params(w1, b1, w2, b2):
    """One-time (init-time) lane-padding of the parameters.

    Padding is mathematically inert: padded w1/b1 columns give relu(0)=0 hidden
    units, padded w2 rows contribute 0, padded b2 columns produce 0 outputs
    that the wrapper slices off.
    """
    obs_size, hidden = w1.shape
    n_actions = w2.shape[1]
    HP = _round_up(hidden, 128)       # padded hidden
    AP = _round_up(n_actions, 128)    # padded actions (lane-dense output)

    w1p = jnp.pad(w1, ((0, 0), (0, HP - hidden)))
    b1p = jnp.pad(b1.reshape(1, -1), ((0, 0), (0, HP - hidden)))
    w2p = jnp.pad(w2, ((0, HP - hidden), (0, AP - n_actions)))
    b2p = jnp.pad(b2.reshape(1, -1), ((0, 0), (0, AP - n_actions)))
    return w1p, b1p, w2p, b2p


@functools.partial(jax.jit, static_argnames=("n_actions", "block_b"))
def net_forward(x, w1p, b1p, w2p, b2p, *, n_actions, block_b=2048):
    """Forward pass of Net via a single fused Pallas kernel.

    x  : (B, obs_size) f32
    w1p: (obs_size, HP) f32   b1p: (1, HP) f32     (pre-padded via prepare_params)
    w2p: (HP, AP) f32         b2p: (1, AP) f32
    returns (B, n_actions) f32
    """
    B, obs_size = x.shape
    HP = w1p.shape[1]
    AP = w2p.shape[1]

    if B <= block_b:
        # Single grid step; block == full batch dim, so no batch padding needed.
        tb, BP = B, B
        xp = x
    else:
        # Large-batch fallback: tile the batch, pad to a tile multiple.
        tb = block_b
        BP = _round_up(B, tb)
        xp = jnp.pad(x, ((0, BP - B), (0, 0)))

    grid = (BP // tb,)

    flops = 2 * BP * (obs_size * HP + HP * AP)
    bytes_accessed = 4 * (BP * obs_size + obs_size * HP + HP + HP * AP + AP + BP * AP)

    out = pl.pallas_call(
        _mlp_kernel,
        out_shape=jax.ShapeDtypeStruct((BP, AP), jnp.float32),
        grid=grid,
        in_specs=[
            pl.BlockSpec((tb, obs_size), lambda i: (i, 0)),   # x: tiled over batch
            pl.BlockSpec((obs_size, HP), lambda i: (0, 0)),   # w1: VMEM-resident
            pl.BlockSpec((1, HP), lambda i: (0, 0)),          # b1: resident
            pl.BlockSpec((HP, AP), lambda i: (0, 0)),         # w2: resident
            pl.BlockSpec((1, AP), lambda i: (0, 0)),          # b2: resident
        ],
        out_specs=pl.BlockSpec((tb, AP), lambda i: (i, 0)),   # lane-dense (AP = 128k)
        compiler_params=pltpu.CompilerParams(
            dimension_semantics=("parallel",),
        ),
        cost_estimate=pl.CostEstimate(
            flops=flops, transcendentals=0, bytes_accessed=bytes_accessed
        ),
    )(xp, w1p, b1p, w2p, b2p)

    if BP != B:
        out = out[:B]
    return out[:, :n_actions]


def init_params(key, obs_size, hidden_size, n_actions):
    """Deterministic init mimicking torch.nn.Linear default (uniform +-1/sqrt(fan_in))."""
    k1, k2, k3, k4 = jax.random.split(key, 4)
    lim1 = 1.0 / jnp.sqrt(obs_size)
    lim2 = 1.0 / jnp.sqrt(hidden_size)
    w1 = jax.random.uniform(k1, (obs_size, hidden_size), jnp.float32, -lim1, lim1)
    b1 = jax.random.uniform(k2, (hidden_size,), jnp.float32, -lim1, lim1)
    w2 = jax.random.uniform(k3, (hidden_size, n_actions), jnp.float32, -lim2, lim2)
    b2 = jax.random.uniform(k4, (n_actions,), jnp.float32, -lim2, lim2)
    return w1, b1, w2, b2


if __name__ == "__main__":
    # FrozenLake-style net: obs_size=16 (one-hot states), hidden=32, n_actions=4.
    obs_size, hidden_size, n_actions = 16, 32, 4

    key = jax.random.PRNGKey(0)
    kx, kp, kx2 = jax.random.split(key, 3)
    w1, b1, w2, b2 = init_params(kp, obs_size, hidden_size, n_actions)

    # One-time padding, outside the per-call path (review item #1).
    w1p, b1p, w2p, b2p = prepare_params(w1, b1, w2, b2)

    ok = True

    # Large batch: single grid step (whole batch is one VMEM tile).
    B = 512
    x = jax.random.normal(kx, (B, obs_size), jnp.float32)
    out = jax.block_until_ready(
        net_forward(x, w1p, b1p, w2p, b2p, n_actions=n_actions)
    )
    ref = jnp.maximum(x @ w1 + b1, 0.0) @ w2 + b2
    ok &= out.shape == (B, n_actions)
    ok &= bool(jnp.allclose(out, ref, atol=1e-5, rtol=1e-5))

    # Small batch (no padding anywhere on the batch axis).
    B2 = 8
    x2 = jax.random.normal(kx2, (B2, obs_size), jnp.float32)
    out2 = jax.block_until_ready(
        net_forward(x2, w1p, b1p, w2p, b2p, n_actions=n_actions)
    )
    ref2 = jnp.maximum(x2 @ w1 + b1, 0.0) @ w2 + b2
    ok &= out2.shape == (B2, n_actions)
    ok &= bool(jnp.allclose(out2, ref2, atol=1e-5, rtol=1e-5))

    assert ok
    print("KERNEL_OK")
</pallas_src>

<mosaic_0001>
module attributes {stable_mosaic.version = 11 : i64} {
  func.func @_mlp_kernel(%arg0: i32, %arg1: memref<512x16xf32, #tpu.memory_space<vmem>>, %arg2: memref<16x128xf32, #tpu.memory_space<vmem>>, %arg3: memref<1x128xf32, #tpu.memory_space<vmem>>, %arg4: memref<128x128xf32, #tpu.memory_space<vmem>>, %arg5: memref<1x128xf32, #tpu.memory_space<vmem>>, %arg6: memref<512x128xf32, #tpu.memory_space<vmem>>) attributes {dimension_semantics = [#tpu.dimension_semantics<parallel>], iteration_bounds = array<i64: 1>, scalar_prefetch = 0 : i64, scratch_operands = 0 : i64, tpu.core_type = #tpu.core_type<tc>, window_params = [{transform_indices = @transform_0, window_bounds = array<i64: 512, 16>}, {pipeline_mode = #tpu.pipeline_mode<synchronous>, transform_indices = @transform_1, window_bounds = array<i64: 16, 128>}, {pipeline_mode = #tpu.pipeline_mode<synchronous>, transform_indices = @transform_2, window_bounds = array<i64: 1, 128>}, {pipeline_mode = #tpu.pipeline_mode<synchronous>, transform_indices = @transform_3, window_bounds = array<i64: 128, 128>}, {pipeline_mode = #tpu.pipeline_mode<synchronous>, transform_indices = @transform_4, window_bounds = array<i64: 1, 128>}, {transform_indices = @transform_5, window_bounds = array<i64: 512, 128>}]} {
    %c0 = arith.constant 0 : index
    %c0_0 = arith.constant 0 : index
    %0 = vector.load %arg1[%c0, %c0_0] : memref<512x16xf32, #tpu.memory_space<vmem>>, vector<512x16xf32>
    %c0_1 = arith.constant 0 : index
    %c0_2 = arith.constant 0 : index
    %1 = vector.load %arg2[%c0_1, %c0_2] : memref<16x128xf32, #tpu.memory_space<vmem>>, vector<16x128xf32>
    %cst = arith.constant dense<0.000000e+00> : vector<512x128xf32>
    %2 = tpu.matmul %0, %1, %cst {dimension_numbers = #tpu.dot_dimension_numbers<[1], [0], [0], [1], [0, 0, 1, 1], [], []>} : vector<512x16xf32>, vector<16x128xf32>, vector<512x128xf32> -> vector<512x128xf32>
    %c0_3 = arith.constant 0 : index
    %c0_4 = arith.constant 0 : index
    %3 = vector.load %arg3[%c0_3, %c0_4] : memref<1x128xf32, #tpu.memory_space<vmem>>, vector<1x128xf32>
    %4 = vector.broadcast %3 : vector<1x128xf32> to vector<512x128xf32>
    %5 = arith.addf %2, %4 : vector<512x128xf32>
    %cst_5 = arith.constant 0.000000e+00 : f32
    %6 = vector.broadcast %cst_5 : f32 to vector<512x128xf32>
    %7 = arith.maximumf %5, %6 : vector<512x128xf32>
    %c0_6 = arith.constant 0 : index
    %c0_7 = arith.constant 0 : index
    %8 = vector.load %arg4[%c0_6, %c0_7] : memref<128x128xf32, #tpu.memory_space<vmem>>, vector<128x128xf32>
    %cst_8 = arith.constant dense<0.000000e+00> : vector<512x128xf32>
    %9 = tpu.matmul %7, %8, %cst_8 {dimension_numbers = #tpu.dot_dimension_numbers<[1], [0], [0], [1], [0, 0, 1, 1], [], []>} : vector<512x128xf32>, vector<128x128xf32>, vector<512x128xf32> -> vector<512x128xf32>
    %c0_9 = arith.constant 0 : index
    %c0_10 = arith.constant 0 : index
    %10 = vector.load %arg5[%c0_9, %c0_10] : memref<1x128xf32, #tpu.memory_space<vmem>>, vector<1x128xf32>
    %11 = vector.broadcast %10 : vector<1x128xf32> to vector<512x128xf32>
    %12 = arith.addf %9, %11 : vector<512x128xf32>
    %c0_11 = arith.constant 0 : index
    %c0_12 = arith.constant 0 : index
    %13 = vector.load %arg6[%c0_11, %c0_12] : memref<512x128xf32, #tpu.memory_space<vmem>>, vector<512x128xf32>
    tpu.vector_store %arg6[%c0_11, %c0_12], %12 {strides = array<i32>} : memref<512x128xf32, #tpu.memory_space<vmem>>, vector<512x128xf32>,
    return
  }
  func.func @transform_0(%arg0: i32) -> (i32, i32) {
    %c0_i32 = arith.constant 0 : i32
    %c0_i32_0 = arith.constant 0 : i32
    return %arg0, %c0_i32 : i32, i32
  }
  func.func @transform_1(%arg0: i32) -> (i32, i32) {
    %c0_i32 = arith.constant 0 : i32
    %c0_i32_0 = arith.constant 0 : i32
    %c0_i32_1 = arith.constant 0 : i32
    return %c0_i32, %c0_i32_0 : i32, i32
  }
  func.func @transform_2(%arg0: i32) -> (i32, i32) {
    %c0_i32 = arith.constant 0 : i32
    %c0_i32_0 = arith.constant 0 : i32
    %c0_i32_1 = arith.constant 0 : i32
    return %c0_i32, %c0_i32_0 : i32, i32
  }
  func.func @transform_3(%arg0: i32) -> (i32, i32) {
    %c0_i32 = arith.constant 0 : i32
    %c0_i32_0 = arith.constant 0 : i32
    %c0_i32_1 = arith.constant 0 : i32
    return %c0_i32, %c0_i32_0 : i32, i32
  }
  func.func @transform_4(%arg0: i32) -> (i32, i32) {
    %c0_i32 = arith.constant 0 : i32
    %c0_i32_0 = arith.constant 0 : i32
    %c0_i32_1 = arith.constant 0 : i32
    return %c0_i32, %c0_i32_0 : i32, i32
  }
  func.func @transform_5(%arg0: i32) -> (i32, i32) {
    %c0_i32 = arith.constant 0 : i32
    %c0_i32_0 = arith.constant 0 : i32
    return %arg0, %c0_i32 : i32, i32
  }
}

</mosaic_0001>

<llo_original>
// kernel: net_forward.1
$region0: #{net_forward.1}
  #allocation0 [shape = 'u32[]', space=smem, size = 0x4, offset = 0x4, fixed_abs, tag = 'smem constant byte address 0x4 - core index']
  #allocation1 [shape = 'u32[144,128]{1,0:T(1,128)}', space=vmem, size = 0x12000, scoped, tag = 'internal scratch']
  %s0 = inlined_call_operand.vmem [shape: f32[512,16], index: 0, kind: input, shape index: {}]
  %s1 = inlined_call_operand.vmem [shape: f32[16,128], index: 1, kind: input, shape index: {}]
  %s2 = inlined_call_operand.vmem [shape: f32[1,128], index: 2, kind: input, shape index: {}]
  %s3 = inlined_call_operand.vmem [shape: f32[128,128], index: 3, kind: input, shape index: {}]
  %s4 = inlined_call_operand.vmem [shape: f32[1,128], index: 4, kind: input, shape index: {}]
  %s5 = inlined_call_operand.vmem [shape: f32[512,128], index: 5, kind: output, shape index: {}]
  %s6 = sld [smem:[#allocation0]]
  $region30: #{net_forward.1} parent=0
    _
  %s8 = ssub.s32 1, %s6
  %s9 = scalar_select 0, %s8, %s6
  // Predicated region
  $region2: #{net_forward.1} parent=0 // pred_check
    _
  $region3: #{net_forward.1} parent=0 // pred_check_branch
    %11 = sbr.rel (0) target = $region5
  $region4: #{net_forward.1} parent=0 // pred_region
    _
  $region5: #{net_forward.1} parent=0 // pred_fallthru
    _
  // Predicated region
  $region6: #{net_forward.1} parent=0 // pred_check
    _
  $region7: #{net_forward.1} parent=0 // pred_check_branch
    %13 = sbr.rel (0) target = $region9
  $region8: #{net_forward.1} parent=0 // pred_region
    _
  $region9: #{net_forward.1} parent=0 // pred_fallthru
    _
  // Predicated region
  $region10: #{net_forward.1} parent=0 // pred_check
    _
  $region11: #{net_forward.1} parent=0 // pred_check_branch
    %15 = sbr.rel (0) target = $region13
  $region12: #{net_forward.1} parent=0 // pred_region
    _
  $region13: #{net_forward.1} parent=0 // pred_fallthru
    _
  // Predicated region
  $region14: #{net_forward.1} parent=0 // pred_check
    _
  $region15: #{net_forward.1} parent=0 // pred_check_branch
    %17 = sbr.rel (0) target = $region17
  $region16: #{net_forward.1} parent=0 // pred_region
    _
  $region17: #{net_forward.1} parent=0 // pred_fallthru
    _
  // Predicated region
  $region18: #{net_forward.1} parent=0 // pred_check
    _
  $region19: #{net_forward.1} parent=0 // pred_check_branch
    %19 = sbr.rel (0) target = $region21
  $region20: #{net_forward.1} parent=0 // pred_region
    _
  $region21: #{net_forward.1} parent=0 // pred_fallthru
    _
  %v20 = vld [vmem:[%s0] sm:$0xff]
  %v21 = vld [vmem:[%s0 + $0x8] sm:$0xff]
  %v22 = vld [vmem:[%s0 + $0x10] sm:$0xff]
  %v23 = vld [vmem:[%s0 + $0x18] sm:$0xff]
  %v24 = vld [vmem:[%s0 + $0x20] sm:$0xff]
  %v25 = vld [vmem:[%s0 + $0x28] sm:$0xff]
  %v26 = vld [vmem:[%s0 + $0x30] sm:$0xff]
  %v27 = vld [vmem:[%s0 + $0x38] sm:$0xff]
  %v28 = vld [vmem:[%s0 + $0x40] sm:$0xff]
  %v29 = vld [vmem:[%s0 + $0x48] sm:$0xff]
  %v30 = vld [vmem:[%s0 + $0x50] sm:$0xff]
  %v31 = vld [vmem:[%s0 + $0x58] sm:$0xff]
  %v32 = vld [vmem:[%s0 + $0x60] sm:$0xff]
  %v33 = vld [vmem:[%s0 + $0x68] sm:$0xff]
  %v34 = vld [vmem:[%s0 + $0x70] sm:$0xff]
  %v35 = vld [vmem:[%s0 + $0x78] sm:$0xff]
  %v36 = vld [vmem:[%s0 + $0x80] sm:$0xff]
  %v37 = vld [vmem:[%s0 + $0x88] sm:$0xff]
  %v38 = vld [vmem:[%s0 + $0x90] sm:$0xff]
  %v39 = vld [vmem:[%s0 + $0x98] sm:$0xff]
  %v40 = vld [vmem:[%s0 + $0xa0] sm:$0xff]
  %v41 = vld [vmem:[%s0 + $0xa8] sm:$0xff]
  %v42 = vld [vmem:[%s0 + $0xb0] sm:$0xff]
  %v43 = vld [vmem:[%s0 + $0xb8] sm:$0xff]
  %v44 = vld [vmem:[%s0 + $0xc0] sm:$0xff]
  %v45 = vld [vmem:[%s0 + $0xc8] sm:$0xff]
  %v46 = vld [vmem:[%s0 + $0xd0] sm:$0xff]
  %v47 = vld [vmem:[%s0 + $0xd8] sm:$0xff]
  %v48 = vld [vmem:[%s0 + $0xe0] sm:$0xff]
  %v49 = vld [vmem:[%s0 + $0xe8] sm:$0xff]
  %v50 = vld [vmem:[%s0 + $0xf0] sm:$0xff]
  %v51 = vld [vmem:[%s0 + $0xf8] sm:$0xff]
  %v52 = vld [vmem:[%s0 + $0x100] sm:$0xff]
  %v53 = vld [vmem:[%s0 + $0x108] sm:$0xff]
  %v54 = vld [vmem:[%s0 + $0x110] sm:$0xff]
  %v55 = vld [vmem:[%s0 + $0x118] sm:$0xff]
  %v56 = vld [vmem:[%s0 + $0x120] sm:$0xff]
  %v57 = vld [vmem:[%s0 + $0x128] sm:$0xff]
  %v58 = vld [vmem:[%s0 + $0x130] sm:$0xff]
  %v59 = vld [vmem:[%s0 + $0x138] sm:$0xff]
  %v60 = vld [vmem:[%s0 + $0x140] sm:$0xff]
  %v61 = vld [vmem:[%s0 + $0x148] sm:$0xff]
  %v62 = vld [vmem:[%s0 + $0x150] sm:$0xff]
  %v63 = vld [vmem:[%s0 + $0x158] sm:$0xff]
  %v64 = vld [vmem:[%s0 + $0x160] sm:$0xff]
  %v65 = vld [vmem:[%s0 + $0x168] sm:$0xff]
  %v66 = vld [vmem:[%s0 + $0x170] sm:$0xff]
  %v67 = vld [vmem:[%s0 + $0x178] sm:$0xff]
  %v68 = vld [vmem:[%s0 + $0x180] sm:$0xff]
  %v69 = vld [vmem:[%s0 + $0x188] sm:$0xff]
  %v70 = vld [vmem:[%s0 + $0x190] sm:$0xff]
  %v71 = vld [vmem:[%s0 + $0x198] sm:$0xff]
  %v72 = vld [vmem:[%s0 + $0x1a0] sm:$0xff]
  %v73 = vld [vmem:[%s0 + $0x1a8] sm:$0xff]
  %v74 = vld [vmem:[%s0 + $0x1b0] sm:$0xff]
  %v75 = vld [vmem:[%s0 + $0x1b8] sm:$0xff]
  %v76 = vld [vmem:[%s0 + $0x1c0] sm:$0xff]
  %v77 = vld [vmem:[%s0 + $0x1c8] sm:$0xff]
  %v78 = vld [vmem:[%s0 + $0x1d0] sm:$0xff]
  %v79 = vld [vmem:[%s0 + $0x1d8] sm:$0xff]
  %v80 = vld [vmem:[%s0 + $0x1e0] sm:$0xff]
  %v81 = vld [vmem:[%s0 + $0x1e8] sm:$0xff]
  %v82 = vld [vmem:[%s0 + $0x1f0] sm:$0xff]
  %v83 = vld [vmem:[%s0 + $0x1f8] sm:$0xff]
  %v84 = vld [vmem:[%s1] sm:$0xff]
  %v85 = vld [vmem:[%s1 + $0x8] sm:$0xff]
  %v86 = vld [vmem:[%s2] sm:$0x1]
  %v88 = vlaneseq
  %v89 = vshrl.u32 %v88, 7
  %v90 = vsub.s32 0, %v89
  %v91 = vrot.slane %v86, %v90
  %vm93 = vcmask 130048
  %v95 = vsel %vm93, %v20, 0
  %v98 = vsel %vm93, %v21, 0
  %v101 = vsel %vm93, %v22, 0
  %v104 = vsel %vm93, %v23, 0
  %v107 = vsel %vm93, %v24, 0
  %v110 = vsel %vm93, %v25, 0
  %v113 = vsel %vm93, %v26, 0
  %v116 = vsel %vm93, %v27, 0
  %v119 = vsel %vm93, %v28, 0
  %v122 = vsel %vm93, %v29, 0
  %v125 = vsel %vm93, %v30, 0
  %v128 = vsel %vm93, %v31, 0
  %v131 = vsel %vm93, %v32, 0
  %v134 = vsel %vm93, %v33, 0
  %v137 = vsel %vm93, %v34, 0
  %v140 = vsel %vm93, %v35, 0
  %v143 = vsel %vm93, %v36, 0
  %v146 = vsel %vm93, %v37, 0
  %v149 = vsel %vm93, %v38, 0
  %v152 = vsel %vm93, %v39, 0
  %v155 = vsel %vm93, %v40, 0
  %v158 = vsel %vm93, %v41, 0
  %v161 = vsel %vm93, %v42, 0
  %v164 = vsel %vm93, %v43, 0
  %v167 = vsel %vm93, %v44, 0
  %v170 = vsel %vm93, %v45, 0
  %v173 = vsel %vm93, %v46, 0
  %v176 = vsel %vm93, %v47, 0
  %v179 = vsel %vm93, %v48, 0
  %v182 = vsel %vm93, %v49, 0
  %v185 = vsel %vm93, %v50, 0
  %v188 = vsel %vm93, %v51, 0
  %v191 = vsel %vm93, %v52, 0
  %v194 = vsel %vm93, %v53, 0
  %v197 = vsel %vm93, %v54, 0
  %v200 = vsel %vm93, %v55, 0
  %v203 = vsel %vm93, %v56, 0
  %v206 = vsel %vm93, %v57, 0
  %v209 = vsel %vm93, %v58, 0
  %v212 = vsel %vm93, %v59, 0
  %v215 = vsel %vm93, %v60, 0
  %v218 = vsel %vm93, %v61, 0
  %v221 = vsel %vm93, %v62, 0
  %v224 = vsel %vm93, %v63, 0
  %v227 = vsel %vm93, %v64, 0
  %v230 = vsel %vm93, %v65, 0
  %v233 = vsel %vm93, %v66, 0
  %v236 = vsel %vm93, %v67, 0
  %v239 = vsel %vm93, %v68, 0
  %v242 = vsel %vm93, %v69, 0
  %v245 = vsel %vm93, %v70, 0
  %v248 = vsel %vm93, %v71, 0
  %v251 = vsel %vm93, %v72, 0
  %v254 = vsel %vm93, %v73, 0
  %v257 = vsel %vm93, %v74, 0
  %v260 = vsel %vm93, %v75, 0
  %v263 = vsel %vm93, %v76, 0
  %v266 = vsel %vm93, %v77, 0
  %v269 = vsel %vm93, %v78, 0
  %v272 = vsel %vm93, %v79, 0
  %v275 = vsel %vm93, %v80, 0
  %v278 = vsel %vm93, %v81, 0
  %v281 = vsel %vm93, %v82, 0
  %v284 = vsel %vm93, %v83, 0
  %286 = vmatprep.subr.mxu0 0.0
  %287 = vmatpush1.msra.mxu0 %v84
  %288 = vmatprep.subr.mxu0 0.0
  %289 = vmatpush1.msra.mxu0 %v85
  %290 = vmatprep.subr.mxu0 0.0
  %291 = vmatpush1.msra.mxu0 0.0
  %292 = vmatprep.subr.mxu0 0.0
  %293 = vmatpush1.msra.mxu0 0.0
  %294 = vmatprep.subr.mxu0 0.0
  %295 = vmatpush1.msra.mxu0 0.0
  %296 = vmatprep.subr.mxu0 0.0
  %297 = vmatpush1.msra.mxu0 0.0
  %298 = vmatprep.subr.mxu0 0.0
  %299 = vmatpush1.msra.mxu0 0.0
  %300 = vmatprep.subr.mxu0 0.0
  %301 = vmatpush1.msra.mxu0 0.0
  %302 = vmatprep.subr.mxu0 0.0
  %303 = vmatpush1.msra.mxu0 0.0
  %304 = vmatprep.subr.mxu0 0.0
  %305 = vmatpush1.msra.mxu0 0.0
  %306 = vmatprep.subr.mxu0 0.0
  %307 = vmatpush1.msra.mxu0 0.0
  %308 = vmatprep.subr.mxu0 0.0
  %309 = vmatpush1.msra.mxu0 0.0
  %310 = vmatprep.subr.mxu0 0.0
  %311 = vmatpush1.msra.mxu0 0.0
  %312 = vmatprep.subr.mxu0 0.0
  %313 = vmatpush1.msra.mxu0 0.0
  %314 = vmatprep.subr.mxu0 0.0
  %315 = vmatpush1.msra.mxu0 0.0
  %316 = vmatprep.subr.mxu0 0.0
  %317 = vmatpush1.msra.mxu0 0.0
  %318 = vmatprep.subr.mxu0 0.0
  %319 = vmatpush1.msra.mxu0 0.0
  %320 = vmatprep.subr.mxu0 0.0
  %321 = vmatpush1.msra.mxu0 0.0
  %322 = vmatprep.subr.mxu0 0.0
  %323 = vmatpush1.msra.mxu0 0.0
  %324 = vmatprep.subr.mxu0 0.0
  %325 = vmatpush1.msra.mxu0 0.0
  %326 = vmatprep.subr.mxu0 0.0
  %327 = vmatpush1.msra.mxu0 0.0
  %328 = vmatprep.subr.mxu0 0.0
  %329 = vmatpush1.msra.mxu0 0.0
  %330 = vmatprep.subr.mxu0 0.0
  %331 = vmatpush1.msra.mxu0 0.0
  %332 = vmatprep.subr.mxu0 0.0
  %333 = vmatpush1.msra.mxu0 0.0
  %334 = vmatprep.subr.mxu0 0.0
  %335 = vmatpush1.msra.mxu0 0.0
  %336 = vmatprep.subr.mxu0 0.0
  %337 = vmatpush1.msra.mxu0 0.0
  %338 = vmatprep.subr.mxu0 0.0
  %339 = vmatpush1.msra.mxu0 0.0
  %340 = vmatprep.subr.mxu0 0.0
  %341 = vmatpush1.msra.mxu0 0.0
  %342 = vmatprep.subr.mxu0 0.0
  %343 = vmatpush1.msra.mxu0 0.0
  %344 = vmatprep.subr.mxu0 0.0
  %345 = vmatpush1.msra.mxu0 0.0
  %346 = vmatprep.subr.mxu0 0.0
  %347 = vmatpush1.msra.mxu0 0.0
  %348 = vmatprep.subr.mxu0 0.0
  %349 = vmatpush1.msra.mxu0 0.0
  %350 = vmatprep.mubr.f32.mxu0 0.0
  %351 = vmatmul.mubr.f32.gmra.mrb[0].mxu0 %v95
  %v352 = vpop.f32.mrb[0].mxu0
  %v353 = vadd.f32 %v91, %v352
  %v354 = vpop.f32.mrb[0].mxu0
  %355 = vmatprep.mubr.f32.mxu0 0.0
  %356 = vmatmul.mubr.f32.gmra.mrb[0].mxu0 %v98
  %v357 = vpop.f32.mrb[0].mxu0
  %v358 = vadd.f32 %v91, %v357
  %v359 = vpop.f32.mrb[0].mxu0
  %360 = vmatprep.mubr.f32.mxu0 0.0
  %361 = vmatmul.mubr.f32.gmra.mrb[0].mxu0 %v101
  %v362 = vpop.f32.mrb[0].mxu0
  %v363 = vadd.f32 %v91, %v362
  %v364 = vpop.f32.mrb[0].mxu0
  %365 = vmatprep.mubr.f32.mxu0 0.0
  %366 = vmatmul.mubr.f32.gmra.mrb[0].mxu0 %v104
  %v367 = vpop.f32.mrb[0].mxu0
  %v368 = vadd.f32 %v91, %v367
  %v369 = vpop.f32.mrb[0].mxu0
  %370 = vmatprep.mubr.f32.mxu0 0.0
  %371 = vmatmul.mubr.f32.gmra.mrb[0].mxu0 %v107
  %v372 = vpop.f32.mrb[0].mxu0
  %v373 = vadd.f32 %v91, %v372
  %v374 = vpop.f32.mrb[0].mxu0
  %375 = vmatprep.mubr.f32.mxu0 0.0
  %376 = vmatmul.mubr.f32.gmra.mrb[0].mxu0 %v110
  %v377 = vpop.f32.mrb[0].mxu0
  %v378 = vadd.f32 %v91, %v377
  %v379 = vpop.f32.mrb[0].mxu0
  %380 = vmatprep.mubr.f32.mxu0 0.0
  %381 = vmatmul.mubr.f32.gmra.mrb[0].mxu0 %v113
  %v382 = vpop.f32.mrb[0].mxu0
  %v383 = vadd.f32 %v91, %v382
  %v384 = vpop.f32.mrb[0].mxu0
  %385 = vmatprep.mubr.f32.mxu0 0.0
  %386 = vmatmul.mubr.f32.gmra.mrb[0].mxu0 %v116
  %v387 = vpop.f32.mrb[0].mxu0
  %v388 = vadd.f32 %v91, %v387
  %v389 = vpop.f32.mrb[0].mxu0
  %390 = vmatprep.mubr.f32.mxu0 0.0
  %391 = vmatmul.mubr.f32.gmra.mrb[0].mxu0 %v119
  %v392 = vpop.f32.mrb[0].mxu0
  %v393 = vadd.f32 %v91, %v392
  %v394 = vpop.f32.mrb[0].mxu0
  %395 = vmatprep.mubr.f32.mxu0 0.0
  %396 = vmatmul.mubr.f32.gmra.mrb[0].mxu0 %v122
  %v397 = vpop.f32.mrb[0].mxu0
  %v398 = vadd.f32 %v91, %v397
  %v399 = vpop.f32.mrb[0].mxu0
  %400 = vmatprep.mubr.f32.mxu0 0.0
  %401 = vmatmul.mubr.f32.gmra.mrb[0].mxu0 %v125
  %v402 = vpop.f32.mrb[0].mxu0
  %v403 = vadd.f32 %v91, %v402
  %v404 = vpop.f32.mrb[0].mxu0
  %405 = vmatprep.mubr.f32.mxu0 0.0
  %406 = vmatmul.mubr.f32.gmra.mrb[0].mxu0 %v128
  %v407 = vpop.f32.mrb[0].mxu0
  %v408 = vadd.f32 %v91, %v407
  %v409 = vpop.f32.mrb[0].mxu0
  %410 = vmatprep.mubr.f32.mxu0 0.0
  %411 = vmatmul.mubr.f32.gmra.mrb[0].mxu0 %v131
  %v412 = vpop.f32.mrb[0].mxu0
  %v413 = vadd.f32 %v91, %v412
  %v414 = vpop.f32.mrb[0].mxu0
  %415 = vmatprep.mubr.f32.mxu0 0.0
  %416 = vmatmul.mubr.f32.gmra.mrb[0].mxu0 %v134
  %v417 = vpop.f32.mrb[0].mxu0
  %v418 = vadd.f32 %v91, %v417
  %v419 = vpop.f32.mrb[0].mxu0
  %420 = vmatprep.mubr.f32.mxu0 0.0
  %421 = vmatmul.mubr.f32.gmra.mrb[0].mxu0 %v137
  %v422 = vpop.f32.mrb[0].mxu0
  %v423 = vadd.f32 %v91, %v422
  %v424 = vpop.f32.mrb[0].mxu0
  %425 = vmatprep.mubr.f32.mxu0 0.0
  %426 = vmatmul.mubr.f32.gmra.mrb[0].mxu0 %v140
  %v427 = vpop.f32.mrb[0].mxu0
  %v428 = vadd.f32 %v91, %v427
  %v429 = vpop.f32.mrb[0].mxu0
  %430 = vmatprep.mubr.f32.mxu0 0.0
  %431 = vmatmul.mubr.f32.gmra.mrb[0].mxu0 %v143
  %v432 = vpop.f32.mrb[0].mxu0
  %v433 = vadd.f32 %v91, %v432
  %v434 = vpop.f32.mrb[0].mxu0
  %435 = vmatprep.mubr.f32.mxu0 0.0
  %436 = vmatmul.mubr.f32.gmra.mrb[0].mxu0 %v146
  %v437 = vpop.f32.mrb[0].mxu0
  %v438 = vadd.f32 %v91, %v437
  %v439 = vpop.f32.mrb[0].mxu0
  %440 = vmatprep.mubr.f32.mxu0 0.0
  %441 = vmatmul.mubr.f32.gmra.mrb[0].mxu0 %v149
  %v442 = vpop.f32.mrb[0].mxu0
  %v443 = vadd.f32 %v91, %v442
  %v444 = vpop.f32.mrb[0].mxu0
  %445 = vmatprep.mubr.f32.mxu0 0.0
  %446 = vmatmul.mubr.f32.gmra.mrb[0].mxu0 %v152
  %v447 = vpop.f32.mrb[0].mxu0
  %v448 = vadd.f32 %v91, %v447
  %v449 = vpop.f32.mrb[0].mxu0
  %450 = vmatprep.mubr.f32.mxu0 0.0
  %451 = vmatmul.mubr.f32.gmra.mrb[0].mxu0 %v155
  %v452 = vpop.f32.mrb[0].mxu0
  %v453 = vadd.f32 %v91, %v452
  %v454 = vpop.f32.mrb[0].mxu0
  %455 = vmatprep.mubr.f32.mxu0 0.0
  %456 = vmatmul.mubr.f32.gmra.mrb[0].mxu0 %v158
  %v457 = vpop.f32.mrb[0].mxu0
  %v458 = vadd.f32 %v91, %v457
  %v459 = vpop.f32.mrb[0].mxu0
  %460 = vmatprep.mubr.f32.mxu0 0.0
  %461 = vmatmul.mubr.f32.gmra.mrb[0].mxu0 %v161
  %v462 = vpop.f32.mrb[0].mxu0
  %v463 = vadd.f32 %v91, %v462
  %v464 = vpop.f32.mrb[0].mxu0
  %465 = vmatprep.mubr.f32.mxu0 0.0
  %466 = vmatmul.mubr.f32.gmra.mrb[0].mxu0 %v164
  %v467 = vpop.f32.mrb[0].mxu0
  %v468 = vadd.f32 %v91, %v467
  %v469 = vpop.f32.mrb[0].mxu0
  %470 = vmatprep.mubr.f32.mxu0 0.0
  %471 = vmatmul.mubr.f32.gmra.mrb[0].mxu0 %v167
  %v472 = vpop.f32.mrb[0].mxu0
  %v473 = vadd.f32 %v91, %v472
  %v474 = vpop.f32.mrb[0].mxu0
  %475 = vmatprep.mubr.f32.mxu0 0.0
  %476 = vmatmul.mubr.f32.gmra.mrb[0].mxu0 %v170
  %v477 = vpop.f32.mrb[0].mxu0
  %v478 = vadd.f32 %v91, %v477
  %v479 = vpop.f32.mrb[0].mxu0
  %480 = vmatprep.mubr.f32.mxu0 0.0
  %481 = vmatmul.mubr.f32.gmra.mrb[0].mxu0 %v173
  %v482 = vpop.f32.mrb[0].mxu0
  %v483 = vadd.f32 %v91, %v482
  %v484 = vpop.f32.mrb[0].mxu0
  %485 = vmatprep.mubr.f32.mxu0 0.0
  %486 = vmatmul.mubr.f32.gmra.mrb[0].mxu0 %v176
  %v487 = vpop.f32.mrb[0].mxu0
  %v488 = vadd.f32 %v91, %v487
  %v489 = vpop.f32.mrb[0].mxu0
  %490 = vmatprep.mubr.f32.mxu0 0.0
  %491 = vmatmul.mubr.f32.gmra.mrb[0].mxu0 %v179
  %v492 = vpop.f32.mrb[0].mxu0
  %v493 = vadd.f32 %v91, %v492
  %v494 = vpop.f32.mrb[0].mxu0
  %495 = vmatprep.mubr.f32.mxu0 0.0
  %496 = vmatmul.mubr.f32.gmra.mrb[0].mxu0 %v182
  %v497 = vpop.f32.mrb[0].mxu0
  %v498 = vadd.f32 %v91, %v497
  %v499 = vpop.f32.mrb[0].mxu0
  %500 = vmatprep.mubr.f32.mxu0 0.0
  %501 = vmatmul.mubr.f32.gmra.mrb[0].mxu0 %v185
  %v502 = vpop.f32.mrb[0].mxu0
  %v503 = vadd.f32 %v91, %v502
  %v504 = vpop.f32.mrb[0].mxu0
  %505 = vmatprep.mubr.f32.mxu0 0.0
  %506 = vmatmul.mubr.f32.gmra.mrb[0].mxu0 %v188
  %v507 = vpop.f32.mrb[0].mxu0
  %v508 = vadd.f32 %v91, %v507
  %v509 = vpop.f32.mrb[0].mxu0
  %510 = vmatprep.mubr.f32.mxu0 0.0
  %511 = vmatmul.mubr.f32.gmra.mrb[0].mxu0 %v191
  %v512 = vpop.f32.mrb[0].mxu0
  %v513 = vadd.f32 %v91, %v512
  %v514 = vpop.f32.mrb[0].mxu0
  %515 = vmatprep.mubr.f32.mxu0 0.0
  %516 = vmatmul.mubr.f32.gmra.mrb[0].mxu0 %v194
  %v517 = vpop.f32.mrb[0].mxu0
  %v518 = vadd.f32 %v91, %v517
  %v519 = vpop.f32.mrb[0].mxu0
  %520 = vmatprep.mubr.f32.mxu0 0.0
  %521 = vmatmul.mubr.f32.gmra.mrb[0].mxu0 %v197
  %v522 = vpop.f32.mrb[0].mxu0
  %v523 = vadd.f32 %v91, %v522
  %v524 = vpop.f32.mrb[0].mxu0
  %525 = vmatprep.mubr.f32.mxu0 0.0
  %526 = vmatmul.mubr.f32.gmra.mrb[0].mxu0 %v200
  %v527 = vpop.f32.mrb[0].mxu0
  %v528 = vadd.f32 %v91, %v527
  %v529 = vpop.f32.mrb[0].mxu0
  %530 = vmatprep.mubr.f32.mxu0 0.0
  %531 = vmatmul.mubr.f32.gmra.mrb[0].mxu0 %v203
  %v532 = vpop.f32.mrb[0].mxu0
  %v533 = vadd.f32 %v91, %v532
  %v534 = vpop.f32.mrb[0].mxu0
  %535 = vmatprep.mubr.f32.mxu0 0.0
  %536 = vmatmul.mubr.f32.gmra.mrb[0].mxu0 %v206
  %v537 = vpop.f32.mrb[0].mxu0
  %v538 = vadd.f32 %v91, %v537
  %v539 = vpop.f32.mrb[0].mxu0
  %540 = vmatprep.mubr.f32.mxu0 0.0
  %541 = vmatmul.mubr.f32.gmra.mrb[0].mxu0 %v209
  %v542 = vpop.f32.mrb[0].mxu0
  %v543 = vadd.f32 %v91, %v542
  %v544 = vpop.f32.mrb[0].mxu0
  %545 = vmatprep.mubr.f32.mxu0 0.0
  %546 = vmatmul.mubr.f32.gmra.mrb[0].mxu0 %v212
  %v547 = vpop.f32.mrb[0].mxu0
  %v548 = vadd.f32 %v91, %v547
  %v549 = vpop.f32.mrb[0].mxu0
  %550 = vmatprep.mubr.f32.mxu0 0.0
  %551 = vmatmul.mubr.f32.gmra.mrb[0].mxu0 %v215
  %v552 = vpop.f32.mrb[0].mxu0
  %v553 = vadd.f32 %v91, %v552
  %v554 = vpop.f32.mrb[0].mxu0
  %555 = vmatprep.mubr.f32.mxu0 0.0
  %556 = vmatmul.mubr.f32.gmra.mrb[0].mxu0 %v218
  %v557 = vpop.f32.mrb[0].mxu0
  %v558 = vadd.f32 %v91, %v557
  %v559 = vpop.f32.mrb[0].mxu0
  %560 = vmatprep.mubr.f32.mxu0 0.0
  %561 = vmatmul.mubr.f32.gmra.mrb[0].mxu0 %v221
  %v562 = vpop.f32.mrb[0].mxu0
  %v563 = vadd.f32 %v91, %v562
  %v564 = vpop.f32.mrb[0].mxu0
  %565 = vmatprep.mubr.f32.mxu0 0.0
  %566 = vmatmul.mubr.f32.gmra.mrb[0].mxu0 %v224
  %v567 = vpop.f32.mrb[0].mxu0
  %v568 = vadd.f32 %v91, %v567
  %v569 = vpop.f32.mrb[0].mxu0
  %570 = vmatprep.mubr.f32.mxu0 0.0
  %571 = vmatmul.mubr.f32.gmra.mrb[0].mxu0 %v227
  %v572 = vpop.f32.mrb[0].mxu0
  %v573 = vadd.f32 %v91, %v572
  %v574 = vpop.f32.mrb[0].mxu0
  %575 = vmatprep.mubr.f32.mxu0 0.0
  %576 = vmatmul.mubr.f32.gmra.mrb[0].mxu0 %v230
  %v577 = vpop.f32.mrb[0].mxu0
  %v578 = vadd.f32 %v91, %v577
  %v579 = vpop.f32.mrb[0].mxu0
  %580 = vmatprep.mubr.f32.mxu0 0.0
  %581 = vmatmul.mubr.f32.gmra.mrb[0].mxu0 %v233
  %v582 = vpop.f32.mrb[0].mxu0
  %v583 = vadd.f32 %v91, %v582
  %v584 = vpop.f32.mrb[0].mxu0
  %585 = vmatprep.mubr.f32.mxu0 0.0
  %586 = vmatmul.mubr.f32.gmra.mrb[0].mxu0 %v236
  %v587 = vpop.f32.mrb[0].mxu0
  %v588 = vadd.f32 %v91, %v587
  %v589 = vpop.f32.mrb[0].mxu0
  %590 = vmatprep.mubr.f32.mxu0 0.0
  %591 = vmatmul.mubr.f32.gmra.mrb[0].mxu0 %v239
  %v592 = vpop.f32.mrb[0].mxu0
  %v593 = vadd.f32 %v91, %v592
  %v594 = vpop.f32.mrb[0].mxu0
  %595 = vmatprep.mubr.f32.mxu0 0.0
  %596 = vmatmul.mubr.f32.gmra.mrb[0].mxu0 %v242
  %v597 = vpop.f32.mrb[0].mxu0
  %v598 = vadd.f32 %v91, %v597
  %v599 = vpop.f32.mrb[0].mxu0
  %600 = vmatprep.mubr.f32.mxu0 0.0
  %601 = vmatmul.mubr.f32.gmra.mrb[0].mxu0 %v245
  %v602 = vpop.f32.mrb[0].mxu0
  %v603 = vadd.f32 %v91, %v602
  %v604 = vpop.f32.mrb[0].mxu0
  %605 = vmatprep.mubr.f32.mxu0 0.0
  %606 = vmatmul.mubr.f32.gmra.mrb[0].mxu0 %v248
  %v607 = vpop.f32.mrb[0].mxu0
  %v608 = vadd.f32 %v91, %v607
  %v609 = vpop.f32.mrb[0].mxu0
  %610 = vmatprep.mubr.f32.mxu0 0.0
  %611 = vmatmul.mubr.f32.gmra.mrb[0].mxu0 %v251
  %v612 = vpop.f32.mrb[0].mxu0
  %v613 = vadd.f32 %v91, %v612
  %v614 = vpop.f32.mrb[0].mxu0
  %615 = vmatprep.mubr.f32.mxu0 0.0
  %616 = vmatmul.mubr.f32.gmra.mrb[0].mxu0 %v254
  %v617 = vpop.f32.mrb[0].mxu0
  %v618 = vadd.f32 %v91, %v617
  %v619 = vpop.f32.mrb[0].mxu0
  %620 = vmatprep.mubr.f32.mxu0 0.0
  %621 = vmatmul.mubr.f32.gmra.mrb[0].mxu0 %v257
  %v622 = vpop.f32.mrb[0].mxu0
  %v623 = vadd.f32 %v91, %v622
  %v624 = vpop.f32.mrb[0].mxu0
  %625 = vmatprep.mubr.f32.mxu0 0.0
  %626 = vmatmul.mubr.f32.gmra.mrb[0].mxu0 %v260
  %v627 = vpop.f32.mrb[0].mxu0
  %v628 = vadd.f32 %v91, %v627
  %v629 = vpop.f32.mrb[0].mxu0
  %630 = vmatprep.mubr.f32.mxu0 0.0
  %631 = vmatmul.mubr.f32.gmra.mrb[0].mxu0 %v263
  %v632 = vpop.f32.mrb[0].mxu0
  %v633 = vadd.f32 %v91, %v632
  %v634 = vpop.f32.mrb[0].mxu0
  %635 = vmatprep.mubr.f32.mxu0 0.0
  %636 = vmatmul.mubr.f32.gmra.mrb[0].mxu0 %v266
  %v637 = vpop.f32.mrb[0].mxu0
  %v638 = vadd.f32 %v91, %v637
  %v639 = vpop.f32.mrb[0].mxu0
  %640 = vmatprep.mubr.f32.mxu0 0.0
  %641 = vmatmul.mubr.f32.gmra.mrb[0].mxu0 %v269
  %v642 = vpop.f32.mrb[0].mxu0
  %v643 = vadd.f32 %v91, %v642
  %v644 = vpop.f32.mrb[0].mxu0
  %645 = vmatprep.mubr.f32.mxu0 0.0
  %646 = vmatmul.mubr.f32.gmra.mrb[0].mxu0 %v272
  %v647 = vpop.f32.mrb[0].mxu0
  %v648 = vadd.f32 %v91, %v647
  %v649 = vpop.f32.mrb[0].mxu0
  %650 = vmatprep.mubr.f32.mxu0 0.0
  %651 = vmatmul.mubr.f32.gmra.mrb[0].mxu0 %v275
  %v652 = vpop.f32.mrb[0].mxu0
  %v653 = vadd.f32 %v91, %v652
  %v654 = vpop.f32.mrb[0].mxu0
  %655 = vmatprep.mubr.f32.mxu0 0.0
  %656 = vmatmul.mubr.f32.gmra.mrb[0].mxu0 %v278
  %v657 = vpop.f32.mrb[0].mxu0
  %v658 = vadd.f32 %v91, %v657
  %v659 = vpop.f32.mrb[0].mxu0
  %660 = vmatprep.mubr.f32.mxu0 0.0
  %661 = vmatmul.mubr.f32.gmra.mrb[0].mxu0 %v281
  %v662 = vpop.f32.mrb[0].mxu0
  %v663 = vadd.f32 %v91, %v662
  %v664 = vpop.f32.mrb[0].mxu0
  %665 = vmatprep.mubr.f32.mxu0 0.0
  %666 = vmatmul.mubr.f32.gmra.mrb[0].mxu0 %v284
  %v667 = vpop.f32.mrb[0].mxu0
  %v668 = vadd.f32 %v91, %v667
  %v669 = vpop.f32.mrb[0].mxu0
  %670 = vdwg.mxu0
  %v671 = vmax.f32 %v353, 0.0
  %v672 = vmax.f32 %v358, 0.0
  %v673 = vmax.f32 %v363, 0.0
  %v674 = vmax.f32 %v368, 0.0
  %v675 = vmax.f32 %v373, 0.0
  %v676 = vmax.f32 %v378, 0.0
  %v677 = vmax.f32 %v383, 0.0
  %v678 = vmax.f32 %v388, 0.0
  %v679 = vmax.f32 %v393, 0.0
  %v680 = vmax.f32 %v398, 0.0
  %v681 = vmax.f32 %v403, 0.0
  %v682 = vmax.f32 %v408, 0.0
  %v683 = vmax.f32 %v413, 0.0
  %v684 = vmax.f32 %v418, 0.0
  %v685 = vmax.f32 %v423, 0.0
  %v686 = vmax.f32 %v428, 0.0
  %v687 = vmax.f32 %v433, 0.0
  %v688 = vmax.f32 %v438, 0.0
  %v689 = vmax.f32 %v443, 0.0
  %v690 = vmax.f32 %v448, 0.0
  %v691 = vmax.f32 %v453, 0.0
  %v692 = vmax.f32 %v458, 0.0
  %v693 = vmax.f32 %v463, 0.0
  %v694 = vmax.f32 %v468, 0.0
  %v695 = vmax.f32 %v473, 0.0
  %v696 = vmax.f32 %v478, 0.0
  %v697 = vmax.f32 %v483, 0.0
  %v698 = vmax.f32 %v488, 0.0
  %v699 = vmax.f32 %v493, 0.0
  %v700 = vmax.f32 %v498, 0.0
  %v701 = vmax.f32 %v503, 0.0
  %v702 = vmax.f32 %v508, 0.0
  %v703 = vmax.f32 %v513, 0.0
  %v704 = vmax.f32 %v518, 0.0
  %v705 = vmax.f32 %v523, 0.0
  %v706 = vmax.f32 %v528, 0.0
  %v707 = vmax.f32 %v533, 0.0
  %v708 = vmax.f32 %v538, 0.0
  %v709 = vmax.f32 %v543, 0.0
  %v710 = vmax.f32 %v548, 0.0
  %v711 = vmax.f32 %v553, 0.0
  %v712 = vmax.f32 %v558, 0.0
  %v713 = vmax.f32 %v563, 0.0
  %v714 = vmax.f32 %v568, 0.0
  %v715 = vmax.f32 %v573, 0.0
  %v716 = vmax.f32 %v578, 0.0
  %v717 = vmax.f32 %v583, 0.0
  %v718 = vmax.f32 %v588, 0.0
  %v719 = vmax.f32 %v593, 0.0
  %v720 = vmax.f32 %v598, 0.0
  %v721 = vmax.f32 %v603, 0.0
  %v722 = vmax.f32 %v608, 0.0
  %v723 = vmax.f32 %v613, 0.0
  %v724 = vmax.f32 %v618, 0.0
  %v725 = vmax.f32 %v623, 0.0
  %v726 = vmax.f32 %v628, 0.0
  %v727 = vmax.f32 %v633, 0.0
  %v728 = vmax.f32 %v638, 0.0
  %v729 = vmax.f32 %v643, 0.0
  %v730 = vmax.f32 %v648, 0.0
  %v731 = vmax.f32 %v653, 0.0
  %v732 = vmax.f32 %v658, 0.0
  %v733 = vmax.f32 %v663, 0.0
  %v734 = vmax.f32 %v668, 0.0
  %v735 = vld [vmem:[%s3] sm:$0xff]
  %v736 = vld [vmem:[%s3 + $0x8] sm:$0xff]
  %v737 = vld [vmem:[%s3 + $0x10] sm:$0xff]
  %v738 = vld [vmem:[%s3 + $0x18] sm:$0xff]
  %v739 = vld [vmem:[%s3 + $0x20] sm:$0xff]
  %v740 = vld [vmem:[%s3 + $0x28] sm:$0xff]
  %v741 = vld [vmem:[%s3 + $0x30] sm:$0xff]
  %v742 = vld [vmem:[%s3 + $0x38] sm:$0xff]
  %v743 = vld [vmem:[%s3 + $0x40] sm:$0xff]
  %v744 = vld [vmem:[%s3 + $0x48] sm:$0xff]
  %v745 = vld [vmem:[%s3 + $0x50] sm:$0xff]
  %v746 = vld [vmem:[%s3 + $0x58] sm:$0xff]
  %v747 = vld [vmem:[%s3 + $0x60] sm:$0xff]
  %v748 = vld [vmem:[%s3 + $0x68] sm:$0xff]
  %v749 = vld [vmem:[%s3 + $0x70] sm:$0xff]
  %v750 = vld [vmem:[%s3 + $0x78] sm:$0xff]
  %v751 = vld [vmem:[%s4] sm:$0x1]
  %v753 = vlaneseq
  %v754 = vshrl.u32 %v753, 7
  %v755 = vsub.s32 0, %v754
  %v756 = vrot.slane %v751, %v755
  %758 = vmatprep.subr.mxu0 0.0
  %759 = vmatpush1.msra.mxu0 %v735
  %760 = vmatprep.subr.mxu0 0.0
  %761 = vmatpush1.msra.mxu0 %v736
  %762 = vmatprep.subr.mxu0 0.0
  %763 = vmatpush1.msra.mxu0 %v737
  %764 = vmatprep.subr.mxu0 0.0
  %765 = vmatpush1.msra.mxu0 %v738
  %766 = vmatprep.subr.mxu0 0.0
  %767 = vmatpush1.msra.mxu0 %v739
  %768 = vmatprep.subr.mxu0 0.0
  %769 = vmatpush1.msra.mxu0 %v740
  %770 = vmatprep.subr.mxu0 0.0
  %771 = vmatpush1.msra.mxu0 %v741
  %772 = vmatprep.subr.mxu0 0.0
  %773 = vmatpush1.msra.mxu0 %v742
  %774 = vmatprep.subr.mxu0 0.0
  %775 = vmatpush1.msra.mxu0 %v743
  %776 = vmatprep.subr.mxu0 0.0
  %777 = vmatpush1.msra.mxu0 %v744
  %778 = vmatprep.subr.mxu0 0.0
  %779 = vmatpush1.msra.mxu0 %v745
  %780 = vmatprep.subr.mxu0 0.0
  %781 = vmatpush1.msra.mxu0 %v746
  %782 = vmatprep.subr.mxu0 0.0
  %783 = vmatpush1.msra.mxu0 %v747
  %784 = vmatprep.subr.mxu0 0.0
  %785 = vmatpush1.msra.mxu0 %v748
  %786 = vmatprep.subr.mxu0 0.0
  %787 = vmatpush1.msra.mxu0 %v749
  %788 = vmatprep.subr.mxu0 0.0
  %789 = vmatpush1.msra.mxu0 %v750
  %790 = vmatprep.subr.mxu0 0.0
  %791 = vmatpush1.msra.mxu0 0.0
  %792 = vmatprep.subr.mxu0 0.0
  %793 = vmatpush1.msra.mxu0 0.0
  %794 = vmatprep.subr.mxu0 0.0
  %795 = vmatpush1.msra.mxu0 0.0
  %796 = vmatprep.subr.mxu0 0.0
  %797 = vmatpush1.msra.mxu0 0.0
  %798 = vmatprep.subr.mxu0 0.0
  %799 = vmatpush1.msra.mxu0 0.0
  %800 = vmatprep.subr.mxu0 0.0
  %801 = vmatpush1.msra.mxu0 0.0
  %802 = vmatprep.subr.mxu0 0.0
  %803 = vmatpush1.msra.mxu0 0.0
  %804 = vmatprep.subr.mxu0 0.0
  %805 = vmatpush1.msra.mxu0 0.0
  %806 = vmatprep.subr.mxu0 0.0
  %807 = vmatpush1.msra.mxu0 0.0
  %808 = vmatprep.subr.mxu0 0.0
  %809 = vmatpush1.msra.mxu0 0.0
  %810 = vmatprep.subr.mxu0 0.0
  %811 = vmatpush1.msra.mxu0 0.0
  %812 = vmatprep.subr.mxu0 0.0
  %813 = vmatpush1.msra.mxu0 0.0
  %814 = vmatprep.subr.mxu0 0.0
  %815 = vmatpush1.msra.mxu0 0.0
  %816 = vmatprep.subr.mxu0 0.0
  %817 = vmatpush1.msra.mxu0 0.0
  %818 = vmatprep.subr.mxu0 0.0
  %819 = vmatpush1.msra.mxu0 0.0
  %820 = vmatprep.subr.mxu0 0.0
  %821 = vmatpush1.msra.mxu0 0.0
  %822 = vmatprep.mubr.f32.mxu0 0.0
  %823 = vmatmul.mubr.f32.gmra.mrb[0].mxu0 %v671
  %v824 = vpop.f32.mrb[0].mxu0
  %v825 = vadd.f32 %v756, %v824
  %v826 = vpop.f32.mrb[0].mxu0
  %827 = vmatprep.mubr.f32.mxu0 0.0
  %828 = vmatmul.mubr.f32.gmra.mrb[0].mxu0 %v672
  %v829 = vpop.f32.mrb[0].mxu0
  %v830 = vadd.f32 %v756, %v829
  %v831 = vpop.f32.mrb[0].mxu0
  %832 = vmatprep.mubr.f32.mxu0 0.0
  %833 = vmatmul.mubr.f32.gmra.mrb[0].mxu0 %v673
  %v834 = vpop.f32.mrb[0].mxu0
  %v835 = vadd.f32 %v756, %v834
  %v836 = vpop.f32.mrb[0].mxu0
  %837 = vmatprep.mubr.f32.mxu0 0.0
  %838 = vmatmul.mubr.f32.gmra.mrb[0].mxu0 %v674
  %v839 = vpop.f32.mrb[0].mxu0
  %v840 = vadd.f32 %v756, %v839
  %v841 = vpop.f32.mrb[0].mxu0
  %842 = vmatprep.mubr.f32.mxu0 0.0
  %843 = vmatmul.mubr.f32.gmra.mrb[0].mxu0 %v675
  %v844 = vpop.f32.mrb[0].mxu0
  %v845 = vadd.f32 %v756, %v844
  %v846 = vpop.f32.mrb[0].mxu0
  %847 = vmatprep.mubr.f32.mxu0 0.0
  %848 = vmatmul.mubr.f32.gmra.mrb[0].mxu0 %v676
  %v849 = vpop.f32.mrb[0].mxu0
  %v850 = vadd.f32 %v756, %v849
  %v851 = vpop.f32.mrb[0].mxu0
  %852 = vmatprep.mubr.f32.mxu0 0.0
  %853 = vmatmul.mubr.f32.gmra.mrb[0].mxu0 %v677
  %v854 = vpop.f32.mrb[0].mxu0
  %v855 = vadd.f32 %v756, %v854
  %v856 = vpop.f32.mrb[0].mxu0
  %857 = vmatprep.mubr.f32.mxu0 0.0
  %858 = vmatmul.mubr.f32.gmra.mrb[0].mxu0 %v678
  %v859 = vpop.f32.mrb[0].mxu0
  %v860 = vadd.f32 %v756, %v859
  %v861 = vpop.f32.mrb[0].mxu0
  %862 = vmatprep.mubr.f32.mxu0 0.0
  %863 = vmatmul.mubr.f32.gmra.mrb[0].mxu0 %v679
  %v864 = vpop.f32.mrb[0].mxu0
  %v865 = vadd.f32 %v756, %v864
  %v866 = vpop.f32.mrb[0].mxu0
  %867 = vmatprep.mubr.f32.mxu0 0.0
  %868 = vmatmul.mubr.f32.gmra.mrb[0].mxu0 %v680
  %v869 = vpop.f32.mrb[0].mxu0
  %v870 = vadd.f32 %v756, %v869
  %v871 = vpop.f32.mrb[0].mxu0
  %872 = vmatprep.mubr.f32.mxu0 0.0
  %873 = vmatmul.mubr.f32.gmra.mrb[0].mxu0 %v681
  %v874 = vpop.f32.mrb[0].mxu0
  %v875 = vadd.f32 %v756, %v874
  %v876 = vpop.f32.mrb[0].mxu0
  %877 = vmatprep.mubr.f32.mxu0 0.0
  %878 = vmatmul.mubr.f32.gmra.mrb[0].mxu0 %v682
  %v879 = vpop.f32.mrb[0].mxu0
  %v880 = vadd.f32 %v756, %v879
  %v881 = vpop.f32.mrb[0].mxu0
  %882 = vmatprep.mubr.f32.mxu0 0.0
  %883 = vmatmul.mubr.f32.gmra.mrb[0].mxu0 %v683
  %v884 = vpop.f32.mrb[0].mxu0
  %v885 = vadd.f32 %v756, %v884
  %v886 = vpop.f32.mrb[0].mxu0
  %887 = vmatprep.mubr.f32.mxu0 0.0
  %888 = vmatmul.mubr.f32.gmra.mrb[0].mxu0 %v684
  %v889 = vpop.f32.mrb[0].mxu0
  %v890 = vadd.f32 %v756, %v889
  %v891 = vpop.f32.mrb[0].mxu0
  %892 = vmatprep.mubr.f32.mxu0 0.0
  %893 = vmatmul.mubr.f32.gmra.mrb[0].mxu0 %v685
  %v894 = vpop.f32.mrb[0].mxu0
  %v895 = vadd.f32 %v756, %v894
  %v896 = vpop.f32.mrb[0].mxu0
  %897 = vmatprep.mubr.f32.mxu0 0.0
  %898 = vmatmul.mubr.f32.gmra.mrb[0].mxu0 %v686
  %v899 = vpop.f32.mrb[0].mxu0
  %v900 = vadd.f32 %v756, %v899
  %v901 = vpop.f32.mrb[0].mxu0
  %902 = vmatprep.mubr.f32.mxu0 0.0
  %903 = vmatmul.mubr.f32.gmra.mrb[0].mxu0 %v687
  %v904 = vpop.f32.mrb[0].mxu0
  %v905 = vadd.f32 %v756, %v904
  %v906 = vpop.f32.mrb[0].mxu0
  %907 = vmatprep.mubr.f32.mxu0 0.0
  %908 = vmatmul.mubr.f32.gmra.mrb[0].mxu0 %v688
  %v909 = vpop.f32.mrb[0].mxu0
  %v910 = vadd.f32 %v756, %v909
  %v911 = vpop.f32.mrb[0].mxu0
  %912 = vmatprep.mubr.f32.mxu0 0.0
  %913 = vmatmul.mubr.f32.gmra.mrb[0].mxu0 %v689
  %v914 = vpop.f32.mrb[0].mxu0
  %v915 = vadd.f32 %v756, %v914
  %v916 = vpop.f32.mrb[0].mxu0
  %917 = vmatprep.mubr.f32.mxu0 0.0
  %918 = vmatmul.mubr.f32.gmra.mrb[0].mxu0 %v690
  %v919 = vpop.f32.mrb[0].mxu0
  %v920 = vadd.f32 %v756, %v919
  %v921 = vpop.f32.mrb[0].mxu0
  %922 = vmatprep.mubr.f32.mxu0 0.0
  %923 = vmatmul.mubr.f32.gmra.mrb[0].mxu0 %v691
  %v924 = vpop.f32.mrb[0].mxu0
  %v925 = vadd.f32 %v756, %v924
  %v926 = vpop.f32.mrb[0].mxu0
  %927 = vmatprep.mubr.f32.mxu0 0.0
  %928 = vmatmul.mubr.f32.gmra.mrb[0].mxu0 %v692
  %v929 = vpop.f32.mrb[0].mxu0
  %v930 = vadd.f32 %v756, %v929
  %v931 = vpop.f32.mrb[0].mxu0
  %932 = vmatprep.mubr.f32.mxu0 0.0
  %933 = vmatmul.mubr.f32.gmra.mrb[0].mxu0 %v693
  %v934 = vpop.f32.mrb[0].mxu0
  %v935 = vadd.f32 %v756, %v934
  %v936 = vpop.f32.mrb[0].mxu0
  %937 = vmatprep.mubr.f32.mxu0 0.0
  %938 = vmatmul.mubr.f32.gmra.mrb[0].mxu0 %v694
  %v939 = vpop.f32.mrb[0].mxu0
  %v940 = vadd.f32 %v756, %v939
  %v941 = vpop.f32.mrb[0].mxu0
  %942 = vmatprep.mubr.f32.mxu0 0.0
  %943 = vmatmul.mubr.f32.gmra.mrb[0].mxu0 %v695
  %v944 = vpop.f32.mrb[0].mxu0
  %v945 = vadd.f32 %v756, %v944
  %v946 = vpop.f32.mrb[0].mxu0
  %947 = vmatprep.mubr.f32.mxu0 0.0
  %948 = vmatmul.mubr.f32.gmra.mrb[0].mxu0 %v696
  %v949 = vpop.f32.mrb[0].mxu0
  %v950 = vadd.f32 %v756, %v949
  %v951 = vpop.f32.mrb[0].mxu0
  %952 = vmatprep.mubr.f32.mxu0 0.0
  %953 = vmatmul.mubr.f32.gmra.mrb[0].mxu0 %v697
  %v954 = vpop.f32.mrb[0].mxu0
  %v955 = vadd.f32 %v756, %v954
  %v956 = vpop.f32.mrb[0].mxu0
  %957 = vmatprep.mubr.f32.mxu0 0.0
  %958 = vmatmul.mubr.f32.gmra.mrb[0].mxu0 %v698
  %v959 = vpop.f32.mrb[0].mxu0
  %v960 = vadd.f32 %v756, %v959
  %v961 = vpop.f32.mrb[0].mxu0
  %962 = vmatprep.mubr.f32.mxu0 0.0
  %963 = vmatmul.mubr.f32.gmra.mrb[0].mxu0 %v699
  %v964 = vpop.f32.mrb[0].mxu0
  %v965 = vadd.f32 %v756, %v964
  %v966 = vpop.f32.mrb[0].mxu0
  %967 = vmatprep.mubr.f32.mxu0 0.0
  %968 = vmatmul.mubr.f32.gmra.mrb[0].mxu0 %v700
  %v969 = vpop.f32.mrb[0].mxu0
  %v970 = vadd.f32 %v756, %v969
  %v971 = vpop.f32.mrb[0].mxu0
  %972 = vmatprep.mubr.f32.mxu0 0.0
  %973 = vmatmul.mubr.f32.gmra.mrb[0].mxu0 %v701
  %v974 = vpop.f32.mrb[0].mxu0
  %v975 = vadd.f32 %v756, %v974
  %v976 = vpop.f32.mrb[0].mxu0
  %977 = vmatprep.mubr.f32.mxu0 0.0
  %978 = vmatmul.mubr.f32.gmra.mrb[0].mxu0 %v702
  %v979 = vpop.f32.mrb[0].mxu0
  %v980 = vadd.f32 %v756, %v979
  %v981 = vpop.f32.mrb[0].mxu0
  %982 = vmatprep.mubr.f32.mxu0 0.0
  %983 = vmatmul.mubr.f32.gmra.mrb[0].mxu0 %v703
  %v984 = vpop.f32.mrb[0].mxu0
  %v985 = vadd.f32 %v756, %v984
  %v986 = vpop.f32.mrb[0].mxu0
  %987 = vmatprep.mubr.f32.mxu0 0.0
  %988 = vmatmul.mubr.f32.gmra.mrb[0].mxu0 %v704
  %v989 = vpop.f32.mrb[0].mxu0
  %v990 = vadd.f32 %v756, %v989
  %v991 = vpop.f32.mrb[0].mxu0
  %992 = vmatprep.mubr.f32.mxu0 0.0
  %993 = vmatmul.mubr.f32.gmra.mrb[0].mxu0 %v705
  %v994 = vpop.f32.mrb[0].mxu0
  %v995 = vadd.f32 %v756, %v994
  %v996 = vpop.f32.mrb[0].mxu0
  %997 = vmatprep.mubr.f32.mxu0 0.0
  %998 = vmatmul.mubr.f32.gmra.mrb[0].mxu0 %v706
  %v999 = vpop.f32.mrb[0].mxu0
  %v1000 = vadd.f32 %v756, %v999
  %v1001 = vpop.f32.mrb[0].mxu0
  %1002 = vmatprep.mubr.f32.mxu0 0.0
  %1003 = vmatmul.mubr.f32.gmra.mrb[0].mxu0 %v707
  %v1004 = vpop.f32.mrb[0].mxu0
  %v1005 = vadd.f32 %v756, %v1004
  %v1006 = vpop.f32.mrb[0].mxu0
  %1007 = vmatprep.mubr.f32.mxu0 0.0
  %1008 = vmatmul.mubr.f32.gmra.mrb[0].mxu0 %v708
  %v1009 = vpop.f32.mrb[0].mxu0
  %v1010 = vadd.f32 %v756, %v1009
  %v1011 = vpop.f32.mrb[0].mxu0
  %1012 = vmatprep.mubr.f32.mxu0 0.0
  %1013 = vmatmul.mubr.f32.gmra.mrb[0].mxu0 %v709
  %v1014 = vpop.f32.mrb[0].mxu0
  %v1015 = vadd.f32 %v756, %v1014
  %v1016 = vpop.f32.mrb[0].mxu0
  %1017 = vmatprep.mubr.f32.mxu0 0.0
  %1018 = vmatmul.mubr.f32.gmra.mrb[0].mxu0 %v710
  %v1019 = vpop.f32.mrb[0].mxu0
  %v1020 = vadd.f32 %v756, %v1019
  %v1021 = vpop.f32.mrb[0].mxu0
  %1022 = vmatprep.mubr.f32.mxu0 0.0
  %1023 = vmatmul.mubr.f32.gmra.mrb[0].mxu0 %v711
  %v1024 = vpop.f32.mrb[0].mxu0
  %v1025 = vadd.f32 %v756, %v1024
  %v1026 = vpop.f32.mrb[0].mxu0
  %1027 = vmatprep.mubr.f32.mxu0 0.0
  %1028 = vmatmul.mubr.f32.gmra.mrb[0].mxu0 %v712
  %v1029 = vpop.f32.mrb[0].mxu0
  %v1030 = vadd.f32 %v756, %v1029
  %v1031 = vpop.f32.mrb[0].mxu0
  %1032 = vmatprep.mubr.f32.mxu0 0.0
  %1033 = vmatmul.mubr.f32.gmra.mrb[0].mxu0 %v713
  %v1034 = vpop.f32.mrb[0].mxu0
  %v1035 = vadd.f32 %v756, %v1034
  %v1036 = vpop.f32.mrb[0].mxu0
  %1037 = vmatprep.mubr.f32.mxu0 0.0
  %1038 = vmatmul.mubr.f32.gmra.mrb[0].mxu0 %v714
  %v1039 = vpop.f32.mrb[0].mxu0
  %v1040 = vadd.f32 %v756, %v1039
  %v1041 = vpop.f32.mrb[0].mxu0
  %1042 = vmatprep.mubr.f32.mxu0 0.0
  %1043 = vmatmul.mubr.f32.gmra.mrb[0].mxu0 %v715
  %v1044 = vpop.f32.mrb[0].mxu0
  %v1045 = vadd.f32 %v756, %v1044
  %v1046 = vpop.f32.mrb[0].mxu0
  %1047 = vmatprep.mubr.f32.mxu0 0.0
  %1048 = vmatmul.mubr.f32.gmra.mrb[0].mxu0 %v716
  %v1049 = vpop.f32.mrb[0].mxu0
  %v1050 = vadd.f32 %v756, %v1049
  %v1051 = vpop.f32.mrb[0].mxu0
  %1052 = vmatprep.mubr.f32.mxu0 0.0
  %1053 = vmatmul.mubr.f32.gmra.mrb[0].mxu0 %v717
  %v1054 = vpop.f32.mrb[0].mxu0
  %v1055 = vadd.f32 %v756, %v1054
  %v1056 = vpop.f32.mrb[0].mxu0
  %1057 = vmatprep.mubr.f32.mxu0 0.0
  %1058 = vmatmul.mubr.f32.gmra.mrb[0].mxu0 %v718
  %v1059 = vpop.f32.mrb[0].mxu0
  %v1060 = vadd.f32 %v756, %v1059
  %v1061 = vpop.f32.mrb[0].mxu0
  %1062 = vmatprep.mubr.f32.mxu0 0.0
  %1063 = vmatmul.mubr.f32.gmra.mrb[0].mxu0 %v719
  %v1064 = vpop.f32.mrb[0].mxu0
  %v1065 = vadd.f32 %v756, %v1064
  %v1066 = vpop.f32.mrb[0].mxu0
  %1067 = vmatprep.mubr.f32.mxu0 0.0
  %1068 = vmatmul.mubr.f32.gmra.mrb[0].mxu0 %v720
  %v1069 = vpop.f32.mrb[0].mxu0
  %v1070 = vadd.f32 %v756, %v1069
  %v1071 = vpop.f32.mrb[0].mxu0
  %1072 = vmatprep.mubr.f32.mxu0 0.0
  %1073 = vmatmul.mubr.f32.gmra.mrb[0].mxu0 %v721
  %v1074 = vpop.f32.mrb[0].mxu0
  %v1075 = vadd.f32 %v756, %v1074
  %v1076 = vpop.f32.mrb[0].mxu0
  %1077 = vmatprep.mubr.f32.mxu0 0.0
  %1078 = vmatmul.mubr.f32.gmra.mrb[0].mxu0 %v722
  %v1079 = vpop.f32.mrb[0].mxu0
  %v1080 = vadd.f32 %v756, %v1079
  %v1081 = vpop.f32.mrb[0].mxu0
  %1082 = vmatprep.mubr.f32.mxu0 0.0
  %1083 = vmatmul.mubr.f32.gmra.mrb[0].mxu0 %v723
  %v1084 = vpop.f32.mrb[0].mxu0
  %v1085 = vadd.f32 %v756, %v1084
  %v1086 = vpop.f32.mrb[0].mxu0
  %1087 = vmatprep.mubr.f32.mxu0 0.0
  %1088 = vmatmul.mubr.f32.gmra.mrb[0].mxu0 %v724
  %v1089 = vpop.f32.mrb[0].mxu0
  %v1090 = vadd.f32 %v756, %v1089
  %v1091 = vpop.f32.mrb[0].mxu0
  %1092 = vmatprep.mubr.f32.mxu0 0.0
  %1093 = vmatmul.mubr.f32.gmra.mrb[0].mxu0 %v725
  %v1094 = vpop.f32.mrb[0].mxu0
  %v1095 = vadd.f32 %v756, %v1094
  %v1096 = vpop.f32.mrb[0].mxu0
  %1097 = vmatprep.mubr.f32.mxu0 0.0
  %1098 = vmatmul.mubr.f32.gmra.mrb[0].mxu0 %v726
  %v1099 = vpop.f32.mrb[0].mxu0
  %v1100 = vadd.f32 %v756, %v1099
  %v1101 = vpop.f32.mrb[0].mxu0
  %1102 = vmatprep.mubr.f32.mxu0 0.0
  %1103 = vmatmul.mubr.f32.gmra.mrb[0].mxu0 %v727
  %v1104 = vpop.f32.mrb[0].mxu0
  %v1105 = vadd.f32 %v756, %v1104
  %v1106 = vpop.f32.mrb[0].mxu0
  %1107 = vmatprep.mubr.f32.mxu0 0.0
  %1108 = vmatmul.mubr.f32.gmra.mrb[0].mxu0 %v728
  %v1109 = vpop.f32.mrb[0].mxu0
  %v1110 = vadd.f32 %v756, %v1109
  %v1111 = vpop.f32.mrb[0].mxu0
  %1112 = vmatprep.mubr.f32.mxu0 0.0
  %1113 = vmatmul.mubr.f32.gmra.mrb[0].mxu0 %v729
  %v1114 = vpop.f32.mrb[0].mxu0
  %v1115 = vadd.f32 %v756, %v1114
  %v1116 = vpop.f32.mrb[0].mxu0
  %1117 = vmatprep.mubr.f32.mxu0 0.0
  %1118 = vmatmul.mubr.f32.gmra.mrb[0].mxu0 %v730
  %v1119 = vpop.f32.mrb[0].mxu0
  %v1120 = vadd.f32 %v756, %v1119
  %v1121 = vpop.f32.mrb[0].mxu0
  %1122 = vmatprep.mubr.f32.mxu0 0.0
  %1123 = vmatmul.mubr.f32.gmra.mrb[0].mxu0 %v731
  %v1124 = vpop.f32.mrb[0].mxu0
  %v1125 = vadd.f32 %v756, %v1124
  %v1126 = vpop.f32.mrb[0].mxu0
  %1127 = vmatprep.mubr.f32.mxu0 0.0
  %1128 = vmatmul.mubr.f32.gmra.mrb[0].mxu0 %v732
  %v1129 = vpop.f32.mrb[0].mxu0
  %v1130 = vadd.f32 %v756, %v1129
  %v1131 = vpop.f32.mrb[0].mxu0
  %1132 = vmatprep.mubr.f32.mxu0 0.0
  %1133 = vmatmul.mubr.f32.gmra.mrb[0].mxu0 %v733
  %v1134 = vpop.f32.mrb[0].mxu0
  %v1135 = vadd.f32 %v756, %v1134
  %v1136 = vpop.f32.mrb[0].mxu0
  %1137 = vmatprep.mubr.f32.mxu0 0.0
  %1138 = vmatmul.mubr.f32.gmra.mrb[0].mxu0 %v734
  %v1139 = vpop.f32.mrb[0].mxu0
  %v1140 = vadd.f32 %v756, %v1139
  %v1141 = vpop.f32.mrb[0].mxu0
  %1142 = vdwg.mxu0
  %1143 = vst [vmem:[%s5] sm:$0xff] %v825
  %1144 = vst [vmem:[%s5 + $0x8] sm:$0xff] %v830
  %1145 = vst [vmem:[%s5 + $0x10] sm:$0xff] %v835
  %1146 = vst [vmem:[%s5 + $0x18] sm:$0xff] %v840
  %1147 = vst [vmem:[%s5 + $0x20] sm:$0xff] %v845
  %1148 = vst [vmem:[%s5 + $0x28] sm:$0xff] %v850
  %1149 = vst [vmem:[%s5 + $0x30] sm:$0xff] %v855
  %1150 = vst [vmem:[%s5 + $0x38] sm:$0xff] %v860
  %1151 = vst [vmem:[%s5 + $0x40] sm:$0xff] %v865
  %1152 = vst [vmem:[%s5 + $0x48] sm:$0xff] %v870
  %1153 = vst [vmem:[%s5 + $0x50] sm:$0xff] %v875
  %1154 = vst [vmem:[%s5 + $0x58] sm:$0xff] %v880
  %1155 = vst [vmem:[%s5 + $0x60] sm:$0xff] %v885
  %1156 = vst [vmem:[%s5 + $0x68] sm:$0xff] %v890
  %1157 = vst [vmem:[%s5 + $0x70] sm:$0xff] %v895
  %1158 = vst [vmem:[%s5 + $0x78] sm:$0xff] %v900
  %1159 = vst [vmem:[%s5 + $0x80] sm:$0xff] %v905
  %1160 = vst [vmem:[%s5 + $0x88] sm:$0xff] %v910
  %1161 = vst [vmem:[%s5 + $0x90] sm:$0xff] %v915
  %1162 = vst [vmem:[%s5 + $0x98] sm:$0xff] %v920
  %1163 = vst [vmem:[%s5 + $0xa0] sm:$0xff] %v925
  %1164 = vst [vmem:[%s5 + $0xa8] sm:$0xff] %v930
  %1165 = vst [vmem:[%s5 + $0xb0] sm:$0xff] %v935
  %1166 = vst [vmem:[%s5 + $0xb8] sm:$0xff] %v940
  %1167 = vst [vmem:[%s5 + $0xc0] sm:$0xff] %v945
  %1168 = vst [vmem:[%s5 + $0xc8] sm:$0xff] %v950
  %1169 = vst [vmem:[%s5 + $0xd0] sm:$0xff] %v955
  %1170 = vst [vmem:[%s5 + $0xd8] sm:$0xff] %v960
  %1171 = vst [vmem:[%s5 + $0xe0] sm:$0xff] %v965
  %1172 = vst [vmem:[%s5 + $0xe8] sm:$0xff] %v970
  %1173 = vst [vmem:[%s5 + $0xf0] sm:$0xff] %v975
  %1174 = vst [vmem:[%s5 + $0xf8] sm:$0xff] %v980
  %1175 = vst [vmem:[%s5 + $0x100] sm:$0xff] %v985
  %1176 = vst [vmem:[%s5 + $0x108] sm:$0xff] %v990
  %1177 = vst [vmem:[%s5 + $0x110] sm:$0xff] %v995
  %1178 = vst [vmem:[%s5 + $0x118] sm:$0xff] %v1000
  %1179 = vst [vmem:[%s5 + $0x120] sm:$0xff] %v1005
  %1180 = vst [vmem:[%s5 + $0x128] sm:$0xff] %v1010
  %1181 = vst [vmem:[%s5 + $0x130] sm:$0xff] %v1015
  %1182 = vst [vmem:[%s5 + $0x138] sm:$0xff] %v1020
  %1183 = vst [vmem:[%s5 + $0x140] sm:$0xff] %v1025
  %1184 = vst [vmem:[%s5 + $0x148] sm:$0xff] %v1030
  %1185 = vst [vmem:[%s5 + $0x150] sm:$0xff] %v1035
  %1186 = vst [vmem:[%s5 + $0x158] sm:$0xff] %v1040
  %1187 = vst [vmem:[%s5 + $0x160] sm:$0xff] %v1045
  %1188 = vst [vmem:[%s5 + $0x168] sm:$0xff] %v1050
  %1189 = vst [vmem:[%s5 + $0x170] sm:$0xff] %v1055
  %1190 = vst [vmem:[%s5 + $0x178] sm:$0xff] %v1060
  %1191 = vst [vmem:[%s5 + $0x180] sm:$0xff] %v1065
  %1192 = vst [vmem:[%s5 + $0x188] sm:$0xff] %v1070
  %1193 = vst [vmem:[%s5 + $0x190] sm:$0xff] %v1075
  %1194 = vst [vmem:[%s5 + $0x198] sm:$0xff] %v1080
  %1195 = vst [vmem:[%s5 + $0x1a0] sm:$0xff] %v1085
  %1196 = vst [vmem:[%s5 + $0x1a8] sm:$0xff] %v1090
  %1197 = vst [vmem:[%s5 + $0x1b0] sm:$0xff] %v1095
  %1198 = vst [vmem:[%s5 + $0x1b8] sm:$0xff] %v1100
  %1199 = vst [vmem:[%s5 + $0x1c0] sm:$0xff] %v1105
  %1200 = vst [vmem:[%s5 + $0x1c8] sm:$0xff] %v1110
  %1201 = vst [vmem:[%s5 + $0x1d0] sm:$0xff] %v1115
  %1202 = vst [vmem:[%s5 + $0x1d8] sm:$0xff] %v1120
  %1203 = vst [vmem:[%s5 + $0x1e0] sm:$0xff] %v1125
  %1204 = vst [vmem:[%s5 + $0x1e8] sm:$0xff] %v1130
  %1205 = vst [vmem:[%s5 + $0x1f0] sm:$0xff] %v1135
  %1206 = vst [vmem:[%s5 + $0x1f8] sm:$0xff] %v1140
  // Predicated region
  $region22: #{net_forward.1} parent=0 // pred_check
    _
  $region23: #{net_forward.1} parent=0 // pred_check_branch
    %1208 = sbr.rel (0) target = $region25
  $region24: #{net_forward.1} parent=0 // pred_region
    _
  $region25: #{net_forward.1} parent=0 // pred_fallthru
    _
  // Predicated region
  $region26: #{net_forward.1} parent=0 // pred_check
    _
  $region27: #{net_forward.1} parent=0 // pred_check_branch
    %1210 = sbr.rel (0) target = $region29
  $region28: #{net_forward.1} parent=0 // pred_region
    _
  $region29: #{net_forward.1} parent=0 // pred_fallthru
    _

</llo_original>
